<compile_context>
chip_gen: v7x
topology: tpu7x:2x2x1
jax: 0.10.0
libtpu: 0.0.40
codegen_flags: <defaults>
</compile_context>

<pallas_src>
import functools

import jax
import jax.numpy as jnp
import numpy as np
from jax.experimental import pallas as pl
from jax.experimental.pallas import tpu as pltpu


def _round_up(a, b):
    return ((a + b - 1) // b) * b


def _cdiv(a, b):
    return (a + b - 1) // b


# ----------------------------- kernels --------------------------------------

def _linear_bias_kernel(x_ref, w_ref, b_ref, o_ref, *, apply_sigmoid):
    # x_ref: (bm, K) bf16 ; w_ref: (K, bn) bf16 ; b_ref: (1, bn) f32 ; o_ref: (bm, bn)
    logits = jnp.dot(x_ref[...], w_ref[...], preferred_element_type=jnp.float32)
    logits = logits + b_ref[...]                     # f32 epilogue (v5e-safe)
    out = jax.nn.sigmoid(logits) if apply_sigmoid else logits
    o_ref[...] = out.astype(o_ref.dtype)


def _linear_nobias_kernel(x_ref, w_ref, o_ref, *, apply_sigmoid):
    logits = jnp.dot(x_ref[...], w_ref[...], preferred_element_type=jnp.float32)
    out = jax.nn.sigmoid(logits) if apply_sigmoid else logits
    o_ref[...] = out.astype(o_ref.dtype)


# -------------------------- one-time weight prep -----------------------------

def prepare_head(w, b=None, *, block_n=1024, compute_dtype=jnp.bfloat16):
    """One-time prep of a PyTorch (out, in) weight for the Pallas matmul.

    Cast to the MXU compute dtype BEFORE transposing (halves transpose bytes),
    pad N to a lane-aligned tile multiple, and transpose to [in, n_pad] so the
    kernel computes x @ W^T with a lane-dense output. Call once at model init
    and reuse across forward calls.
    """
    N, K = w.shape
    grid_n = _cdiv(N, block_n)
    bn = _round_up(_cdiv(N, grid_n), 128)      # minimal-padding, 128-aligned tile
    n_pad = grid_n * bn

    w_c = w.astype(compute_dtype)
    if n_pad != N:
        w_c = jnp.pad(w_c, ((0, n_pad - N), (0, 0)))
    w_t = w_c.T                                 # [K, n_pad], lane-dense N

    b_p = None
    if b is not None:
        b_p = jnp.pad(b.astype(jnp.float32), (0, n_pad - N)).reshape(1, n_pad)

    return {"w_t": w_t, "b": b_p, "n": N, "bn": bn}


# ------------------------------ forward core ---------------------------------

def _linear_forward_prepared(x, head, *, apply_sigmoid, block_m=2048,
                             out_dtype=None, compute_dtype=jnp.bfloat16,
                             vmem_budget=40 * 1024 * 1024):
    B, K = x.shape
    w_t, b_p, N, bn = head["w_t"], head["b"], head["n"], head["bn"]
    assert w_t.shape[0] == K, "x feature dim must match weight in-dim"
    n_pad = w_t.shape[1]
    grid_n = n_pad // bn

    if out_dtype is None:
        # bf16 probabilities halve the dominant B*N writeback; logits stay f32.
        out_dtype = jnp.bfloat16 if apply_sigmoid else jnp.float32

    in_bytes = jnp.dtype(compute_dtype).itemsize
    out_bytes = jnp.dtype(out_dtype).itemsize

    # Pick bm: as large as possible (ideally grid_m == 1 so W^T streams once),
    # with minimal B padding, shrinking only if the double-buffered footprint
    # would blow the VMEM budget.
    bm_cap = max(block_m, 8)
    while True:
        grid_m = _cdiv(B, bm_cap)
        bm = _round_up(_cdiv(B, grid_m), 8)
        footprint = 2 * (bm * K * in_bytes + K * bn * in_bytes
                         + bm * bn * out_bytes
                         + (bn * 4 if b_p is not None else 0))
        if footprint <= vmem_budget or bm_cap <= 64:
            break
        bm_cap //= 2
    b_pad = grid_m * bm

    # Cast x once in the wrapper (no per-grid-step in-kernel cast), pad only if needed.
    x_p = x.astype(compute_dtype)
    if b_pad != B:
        x_p = jnp.pad(x_p, ((0, b_pad - B), (0, 0)))

    # Leave headroom under v7x's 64 MiB physical VMEM.
    vmem_limit = int(min(max(footprint * 5 // 4, 16 << 20), 48 << 20))

    if b_p is not None:
        kernel = functools.partial(_linear_bias_kernel, apply_sigmoid=apply_sigmoid)
        in_specs = [
            pl.BlockSpec((bm, K), lambda i, j: (i, 0)),   # x tile   (bf16)
            pl.BlockSpec((K, bn), lambda i, j: (0, j)),   # W^T tile (bf16)
            pl.BlockSpec((1, bn), lambda i, j: (0, j)),   # bias tile (f32)
        ]
        operands = (x_p, w_t, b_p)
    else:
        kernel = functools.partial(_linear_nobias_kernel, apply_sigmoid=apply_sigmoid)
        in_specs = [
            pl.BlockSpec((bm, K), lambda i, j: (i, 0)),
            pl.BlockSpec((K, bn), lambda i, j: (0, j)),
        ]
        operands = (x_p, w_t)

    out = pl.pallas_call(
        kernel,
        out_shape=jax.ShapeDtypeStruct((b_pad, n_pad), out_dtype),
        grid_spec=pltpu.PrefetchScalarGridSpec(
            num_scalar_prefetch=0,
            grid=(grid_m, grid_n),
            in_specs=in_specs,
            out_specs=pl.BlockSpec((bm, bn), lambda i, j: (i, j)),
        ),
        compiler_params=pltpu.CompilerParams(
            dimension_semantics=("parallel", "parallel"),
            vmem_limit_bytes=vmem_limit,
        ),
    )(*operands)

    if b_pad != B or n_pad != N:
        out = out[:B, :N]
    return out


# --------------------------- LinearNet.forward -------------------------------

def linear_net_forward(
    x,
    class_w=None,
    class_b=None,
    *,
    class_of_interest=None,
    class_mask=None,
    return_feats=False,
    return_logits=False,
    prepared_head=None,       # output of prepare_head(class_w, class_b): hoists weight prep
    block_m=2048,
    block_n=1024,
    compute_dtype=jnp.bfloat16,
    out_dtype=None,
):
    """Matches LinearNet.forward (class_emb path; user/context embs unused there)."""
    loc_emb = x  # self.feats is nn.Identity, so use_feats_as_input is a no-op distinction
    if return_feats:
        return loc_emb

    apply_sigmoid = not return_logits

    if class_of_interest is not None:
        # eval_single_class: x @ W[c, :] (+ b[c]) -> a 1-output linear on a sliced row.
        w = class_w[class_of_interest][None, :]
        b = None if class_b is None else class_b[class_of_interest][None]
        head = prepare_head(w, b, block_n=block_n, compute_dtype=compute_dtype)
        pred = _linear_forward_prepared(loc_emb, head, apply_sigmoid=apply_sigmoid,
                                        block_m=block_m, out_dtype=out_dtype,
                                        compute_dtype=compute_dtype)
        return pred[:, 0]

    if class_mask is not None:
        # class_masked_eval: gather masked rows wrapper-side, same kernel after.
        w = class_w[class_mask]
        b = None if class_b is None else class_b[class_mask]
        head = prepare_head(w, b, block_n=block_n, compute_dtype=compute_dtype)
        return _linear_forward_prepared(loc_emb, head, apply_sigmoid=apply_sigmoid,
                                        block_m=block_m, out_dtype=out_dtype,
                                        compute_dtype=compute_dtype)

    if prepared_head is None:
        prepared_head = prepare_head(class_w, class_b, block_n=block_n,
                                     compute_dtype=compute_dtype)
    return _linear_forward_prepared(loc_emb, prepared_head, apply_sigmoid=apply_sigmoid,
                                    block_m=block_m, out_dtype=out_dtype,
                                    compute_dtype=compute_dtype)


# ------------------------------- reference -----------------------------------

def linear_net_ref(x, w, b=None, *, return_logits=False):
    logits = x @ w.T
    if b is not None:
        logits = logits + b
    return logits if return_logits else jax.nn.sigmoid(logits)


if __name__ == "__main__":
    key = jax.random.PRNGKey(0)
    batch, num_inputs, num_classes = 12, 32, 40  # small, non-aligned shapes

    k_x, k_w, k_b = jax.random.split(key, 3)
    bound = 1.0 / (num_inputs ** 0.5)
    x = jax.random.normal(k_x, (batch, num_inputs), dtype=jnp.float32)
    class_w = jax.random.uniform(k_w, (num_classes, num_inputs), jnp.float32, -bound, bound)
    class_b = jax.random.uniform(k_b, (num_classes,), jnp.float32, -bound, bound)

    # Weight prep hoisted out of the per-call path (done once, reused below).
    head = prepare_head(class_w, class_b)

    # Default path: sigmoid(class_emb(x))   (bf16 MXU + bf16 out -> relaxed tol)
    out = jax.block_until_ready(
        linear_net_forward(x, class_w, class_b, prepared_head=head))
    ref = linear_net_ref(x, class_w, class_b)
    assert out.shape == ref.shape
    assert jnp.allclose(out.astype(jnp.float32), ref, atol=2e-2, rtol=2e-2), \
        "mismatch vs reference (default path)"

    # Logits path (f32 output)
    logits = jax.block_until_ready(
        linear_net_forward(x, class_w, class_b, prepared_head=head, return_logits=True))
    ref_logits = linear_net_ref(x, class_w, class_b, return_logits=True)
    assert jnp.allclose(logits.astype(jnp.float32), ref_logits, atol=2e-2, rtol=2e-2), \
        "mismatch (logits path)"

    # No-bias path (include_bias=0) exercises the no-bias kernel variant.
    out_nb = jax.block_until_ready(linear_net_forward(x, class_w, None))
    ref_nb = linear_net_ref(x, class_w, None)
    assert jnp.allclose(out_nb.astype(jnp.float32), ref_nb, atol=2e-2, rtol=2e-2), \
        "mismatch (no-bias path)"

    # Single-class path
    coi = 7
    single = jax.block_until_ready(
        linear_net_forward(x, class_w, class_b, class_of_interest=coi))
    ref_single = jax.nn.sigmoid(x @ class_w[coi] + class_b[coi])
    assert jnp.allclose(single.astype(jnp.float32), ref_single, atol=2e-2, rtol=2e-2), \
        "mismatch (single-class path)"

    # Class-mask path (wrapper-side gather, same kernel after)
    mask = np.zeros((num_classes,), dtype=bool)
    mask[::3] = True
    masked = jax.block_until_ready(
        linear_net_forward(x, class_w, class_b, class_mask=mask))
    ref_masked = jax.nn.sigmoid(x @ class_w[mask].T + class_b[mask])
    assert masked.shape == ref_masked.shape
    assert jnp.allclose(masked.astype(jnp.float32), ref_masked, atol=2e-2, rtol=2e-2), \
        "mismatch (class-mask path)"

    print("KERNEL_OK")
</pallas_src>

<mosaic_0001>
module attributes {stable_mosaic.version = 11 : i64} {
  func.func @_linear_bias_kernel(%arg0: i32, %arg1: i32, %arg2: memref<16x32xbf16, #tpu.memory_space<vmem>>, %arg3: memref<32x128xbf16, #tpu.memory_space<vmem>>, %arg4: memref<1x128xf32, #tpu.memory_space<vmem>>, %arg5: memref<16x128xbf16, #tpu.memory_space<vmem>>) attributes {dimension_semantics = [#tpu.dimension_semantics<parallel>, #tpu.dimension_semantics<parallel>], iteration_bounds = array<i64: 1, 1>, scalar_prefetch = 0 : i64, scratch_operands = 0 : i64, tpu.core_type = #tpu.core_type<tc>, window_params = [{transform_indices = @transform_0, window_bounds = array<i64: 16, 32>}, {transform_indices = @transform_1, window_bounds = array<i64: 32, 128>}, {transform_indices = @transform_2, window_bounds = array<i64: 1, 128>}, {transform_indices = @transform_3, window_bounds = array<i64: 16, 128>}]} {
    %c0 = arith.constant 0 : index
    %c0_0 = arith.constant 0 : index
    %0 = vector.load %arg2[%c0, %c0_0] : memref<16x32xbf16, #tpu.memory_space<vmem>>, vector<16x32xbf16>
    %c0_1 = arith.constant 0 : index
    %c0_2 = arith.constant 0 : index
    %1 = vector.load %arg3[%c0_1, %c0_2] : memref<32x128xbf16, #tpu.memory_space<vmem>>, vector<32x128xbf16>
    %cst = arith.constant dense<0.000000e+00> : vector<16x128xf32>
    %2 = tpu.matmul %0, %1, %cst {dimension_numbers = #tpu.dot_dimension_numbers<[1], [0], [0], [1], [0, 0, 1, 1], [], []>} : vector<16x32xbf16>, vector<32x128xbf16>, vector<16x128xf32> -> vector<16x128xf32>
    %c0_3 = arith.constant 0 : index
    %c0_4 = arith.constant 0 : index
    %3 = vector.load %arg4[%c0_3, %c0_4] : memref<1x128xf32, #tpu.memory_space<vmem>>, vector<1x128xf32>
    %4 = vector.broadcast %3 : vector<1x128xf32> to vector<16x128xf32>
    %5 = arith.addf %2, %4 : vector<16x128xf32>
    %6 = arith.negf %5 : vector<16x128xf32>
    %7 = math.exp %6 : vector<16x128xf32>
    %cst_5 = arith.constant 1.000000e+00 : f32
    %8 = vector.broadcast %cst_5 : f32 to vector<16x128xf32>
    %9 = arith.addf %8, %7 : vector<16x128xf32>
    %10 = arith.divf %8, %9 : vector<16x128xf32>
    %11 = arith.truncf %10 : vector<16x128xf32> to vector<16x128xbf16>
    %c0_6 = arith.constant 0 : index
    %c0_7 = arith.constant 0 : index
    %12 = vector.load %arg5[%c0_6, %c0_7] : memref<16x128xbf16, #tpu.memory_space<vmem>>, vector<16x128xbf16>
    tpu.vector_store %arg5[%c0_6, %c0_7], %11 {strides = array<i32>} : memref<16x128xbf16, #tpu.memory_space<vmem>>, vector<16x128xbf16>,
    return
  }
  func.func @transform_0(%arg0: i32, %arg1: i32) -> (i32, i32) {
    %c0_i32 = arith.constant 0 : i32
    %c0_i32_0 = arith.constant 0 : i32
    return %arg0, %c0_i32 : i32, i32
  }
  func.func @transform_1(%arg0: i32, %arg1: i32) -> (i32, i32) {
    %c0_i32 = arith.constant 0 : i32
    %c0_i32_0 = arith.constant 0 : i32
    return %c0_i32, %arg1 : i32, i32
  }
  func.func @transform_2(%arg0: i32, %arg1: i32) -> (i32, i32) {
    %c0_i32 = arith.constant 0 : i32
    %c0_i32_0 = arith.constant 0 : i32
    return %c0_i32, %arg1 : i32, i32
  }
  func.func @transform_3(%arg0: i32, %arg1: i32) -> (i32, i32) {
    %c0_i32 = arith.constant 0 : i32
    return %arg0, %arg1 : i32, i32
  }
}

</mosaic_0001>

<llo_original>
// kernel: tpu_custom_call.1
$region0: #{tpu_custom_call.1}
  #allocation0 [shape = 'u32[]', space=smem, size = 0x4, offset = 0x4, fixed_abs, tag = 'smem constant byte address 0x4 - core index']
  #allocation1 [shape = 'u32[144,128]{1,0:T(1,128)}', space=vmem, size = 0x12000, scoped, tag = 'internal scratch']
  %s0 = inlined_call_operand.hbm [shape: bf16[16,32], index: 0, kind: input, shape index: {}]
  %s1 = inlined_call_operand.hbm [shape: bf16[32,128], index: 1, kind: input, shape index: {}]
  %s2 = inlined_call_operand.vmem [shape: f32[1,128], index: 2, kind: input, shape index: {}]
  %s3 = inlined_call_operand.hbm [shape: bf16[16,128], index: 3, kind: output, shape index: {}]
  %s4 = sld [smem:[#allocation0]]
  $region30: #{tpu_custom_call.1} parent=0
    _
  %s6 = ssub.s32 1, %s4
  %s7 = scalar_select 0, %s6, %s4
  $region1: #{tpu_custom_call.1} parent=0
    #allocation2 [shape = 'u8[4096]{0}', space=vmem, size = 0x1000, scoped, tag = 'input window, operand 0, single buffered']
    #allocation3 [shape = 's32[1]{0}', space=sflag, size = 0x4, scoped, tag = 'scoped memory for tpu_custom_call.1']
    #allocation4 [shape = 's32[1]{0}', space=sflag, size = 0x4, scoped, tag = 'scoped memory for tpu_custom_call.1']
    #allocation5 [shape = 'u8[8192]{0}', space=vmem, size = 0x2000, scoped, tag = 'input window, operand 1, single buffered']
    #allocation6 [shape = 's32[1]{0}', space=sflag, size = 0x4, scoped, tag = 'scoped memory for tpu_custom_call.1']
    #allocation7 [shape = 'u8[4096]{0}', space=vmem, size = 0x1000, scoped, tag = 'output window, operand 0, single buffered']
    %8 = vsyncpa [#allocation3], 0
    %9 = vsyncpa [#allocation6], 0
    %10 = vsyncpa [#allocation4], 0
    // Predicated region
    $region2: #{tpu_custom_call.1} parent=1 // pred_check
      _
    $region3: #{tpu_custom_call.1} parent=1 // pred_check_branch
      %12 = sbr.rel (0) target = $region5
    $region4: #{tpu_custom_call.1} parent=1 // pred_region
      %s14 = ssub.s32 128, 128
      %15 = vsyncadd [#allocation3], %s14
      %s16 = sshll.u32 [#allocation2], 4
      %s17 = int_to_ptr.vmem [resolvable:$true] %s16
      %22 = dma.hbm_to_vmem [thread:$0]  %s0, 128, %s17, [#allocation3], 64, 64, 4
    $region5: #{tpu_custom_call.1} parent=1 // pred_fallthru
      _
    // Predicated region
    $region6: #{tpu_custom_call.1} parent=1 // pred_check
      _
    $region7: #{tpu_custom_call.1} parent=1 // pred_check_branch
      %24 = sbr.rel (0) target = $region9
    $region8: #{tpu_custom_call.1} parent=1 // pred_region
      %s26 = ssub.s32 256, 256
      %27 = vsyncadd [#allocation6], %s26
      %s28 = sshll.u32 [#allocation5], 4
      %s29 = int_to_ptr.vmem [resolvable:$true] %s28
      %34 = dma.hbm_to_vmem [thread:$0]  %s1, 256, %s29, [#allocation6], 64, 64, 4
    $region9: #{tpu_custom_call.1} parent=1 // pred_fallthru
      _
    // Predicated region
    $region10: #{tpu_custom_call.1} parent=1 // pred_check
      _
    $region11: #{tpu_custom_call.1} parent=1 // pred_check_branch
      %36 = sbr.rel (0) target = $region13
    $region12: #{tpu_custom_call.1} parent=1 // pred_region
      _
    $region13: #{tpu_custom_call.1} parent=1 // pred_fallthru
      _
    // Predicated region
    $region14: #{tpu_custom_call.1} parent=1 // pred_check
      _
    $region15: #{tpu_custom_call.1} parent=1 // pred_check_branch
      %38 = sbr.rel (0) target = $region17
    $region16: #{tpu_custom_call.1} parent=1 // pred_region
      %39 = dma.done [#allocation3], 128
    $region17: #{tpu_custom_call.1} parent=1 // pred_fallthru
      _
    // Predicated region
    $region18: #{tpu_custom_call.1} parent=1 // pred_check
      _
    $region19: #{tpu_custom_call.1} parent=1 // pred_check_branch
      %41 = sbr.rel (0) target = $region21
    $region20: #{tpu_custom_call.1} parent=1 // pred_region
      %42 = dma.done [#allocation6], 256
    $region21: #{tpu_custom_call.1} parent=1 // pred_fallthru
      _
    %v44 = vld [vmem:[#allocation2] sm:$0xf]
    %v45 = vld [vmem:[#allocation2 + $0x4] sm:$0xf]
    %v46 = vld [vmem:[#allocation5] sm:$0xf]
    %v47 = vld [vmem:[#allocation5 + $0x4] sm:$0xf]
    %v48 = vld [vmem:[#allocation5 + $0x8] sm:$0xf]
    %v49 = vld [vmem:[#allocation5 + $0xc] sm:$0xf]
    %v50 = vld [vmem:[%s2] sm:$0x1]
    %v52 = vlaneseq
    %v53 = vshrl.u32 %v52, 7
    %v54 = vsub.s32 0, %v53
    %v55 = vrot.slane %v50, %v54
    %v59 = vunpack.c.l.b16 %v44
    %v60 = vunpack.c.l.b16 %v45
    %v61 = vpack.c.b16 %v60, %v59
    %v66 = vunpack.c.l.b16 %v46
    %v67 = vunpack.c.l.b16 %v47
    %v68 = vunpack.c.l.b16 %v48
    %v69 = vunpack.c.l.b16 %v49
    %v70 = vpack.c.b16 %v67, %v66
    %v71 = vpack.c.b16 %v69, %v68
    %vm74 = vcmask 261120
    %v76 = vsel %vm74, %v61, 0
    %78 = vmatprep.subr.bf16.mxu0 0
    %79 = vmatpush1.bf16.msra.mxu0 %v70
    %80 = vmatprep.subr.bf16.mxu0 0
    %81 = vmatpush1.bf16.msra.mxu0 %v71
    %82 = vmatprep.subr.bf16.mxu0 0
    %83 = vmatpush1.bf16.msra.mxu0 0
    %84 = vmatprep.subr.bf16.mxu0 0
    %85 = vmatpush1.bf16.msra.mxu0 0
    %86 = vmatprep.subr.bf16.mxu0 0
    %87 = vmatpush1.bf16.msra.mxu0 0
    %88 = vmatprep.subr.bf16.mxu0 0
    %89 = vmatpush1.bf16.msra.mxu0 0
    %90 = vmatprep.subr.bf16.mxu0 0
    %91 = vmatpush1.bf16.msra.mxu0 0
    %92 = vmatprep.subr.bf16.mxu0 0
    %93 = vmatpush1.bf16.msra.mxu0 0
    %94 = vmatprep.subr.bf16.mxu0 0
    %95 = vmatpush1.bf16.msra.mxu0 0
    %96 = vmatprep.subr.bf16.mxu0 0
    %97 = vmatpush1.bf16.msra.mxu0 0
    %98 = vmatprep.subr.bf16.mxu0 0
    %99 = vmatpush1.bf16.msra.mxu0 0
    %100 = vmatprep.subr.bf16.mxu0 0
    %101 = vmatpush1.bf16.msra.mxu0 0
    %102 = vmatprep.subr.bf16.mxu0 0
    %103 = vmatpush1.bf16.msra.mxu0 0
    %104 = vmatprep.subr.bf16.mxu0 0
    %105 = vmatpush1.bf16.msra.mxu0 0
    %106 = vmatprep.subr.bf16.mxu0 0
    %107 = vmatpush1.bf16.msra.mxu0 0
    %108 = vmatprep.subr.bf16.mxu0 0
    %109 = vmatpush1.bf16.msra.mxu0 0
    %110 = vmatprep.mubr.bf16.mxu0 0
    %111 = vmatmul.mubr.bf16.gmra.mrb[0].mxu0 %v76
    %v112 = vpop.f32.mrb[0].mxu0
    %v113 = vadd.f32 %v55, %v112
    %v114 = vpop.f32.mrb[0].mxu0
    %v115 = vpop.f32.mrb[0].mxu0
    %v116 = vadd.f32 %v55, %v115
    %v117 = vpop.f32.mrb[0].mxu0
    %118 = vdwg.mxu0
    %v119 = vxor.u32 %v113, 2147483648
    %v120 = vxor.u32 %v116, 2147483648
    %v121 = vmul.f32 %v119, 1.442695
    %v122 = vpow.pop %v121
    %v123 = vmul.f32 %v120, 1.442695
    %v124 = vpow.pop %v123
    %v125 = vadd.f32 %v122, 1.0
    %v126 = vadd.f32 %v124, 1.0
    %v127 = vrcp.pop %v125
    %v128 = vmul.f32 1.0, %v127
    %v129 = vrcp.pop %v126
    %v130 = vmul.f32 1.0, %v129
    %v131 = vpack.c.bf16 %v130, %v128
    %v133 = vunpack.c.l.b16 %v131
    %v134 = vunpack.c.h.b16 %v131
    %v135 = vpack.c.b16 %v133, %v133
    %v136 = vpack.c.b16 %v134, %v134
    %139 = vst [vmem:[#allocation7] sm:$0xf] %v135
    %140 = vst [vmem:[#allocation7 + $0x4] sm:$0xf] %v136
    // Predicated region
    $region22: #{tpu_custom_call.1} parent=1 // pred_check
      _
    $region23: #{tpu_custom_call.1} parent=1 // pred_check_branch
      %142 = sbr.rel (0) target = $region25
    $region24: #{tpu_custom_call.1} parent=1 // pred_region
      %s144 = ssub.s32 128, 128
      %145 = vsyncadd [#allocation4], %s144
      %s146 = sshll.u32 [#allocation7], 4
      %s147 = int_to_ptr.vmem [resolvable:$true] %s146
      %152 = dma.vmem_to_hbm [thread:$0]  %s147, 128, %s3, [#allocation4], 64, 64, 4
    $region25: #{tpu_custom_call.1} parent=1 // pred_fallthru
      _
    // Predicated region
    $region26: #{tpu_custom_call.1} parent=1 // pred_check
      _
    $region27: #{tpu_custom_call.1} parent=1 // pred_check_branch
      %154 = sbr.rel (0) target = $region29
    $region28: #{tpu_custom_call.1} parent=1 // pred_region
      %155 = dma.done [#allocation4], 128
    $region29: #{tpu_custom_call.1} parent=1 // pred_fallthru
      _
    %156 = vsyncpa [#allocation3], 1
    %157 = vsyncpa [#allocation6], 1
    %158 = vsyncpa [#allocation4], 1

</llo_original>
